<compile_context>
chip_gen: v5e
topology: v5e:2x2
jax: 0.10.0
libtpu: 0.0.40
codegen_flags: <defaults>
</compile_context>

<pallas_src>
import functools

import jax
import jax.numpy as jnp
from jax.experimental import pallas as pl
from jax.experimental.pallas import tpu as pltpu

_ROW_ALIGN = 32  # u8 sublane packing (also covers bf16's 16 and f32's 8)


def _input_transform_kernel(x_ref, o_ref, *, scale, bias, clamp_min, clamp_max,
                            do_clip, clip_packed):
    x = x_ref[...]
    if do_clip and clip_packed:
        # Integer input + integer bounds: clamp on packed vregs (4x elems/vreg
        # for u8) before the convert; equivalent to clamp-after-float here.
        x = jnp.clip(x, jnp.asarray(clamp_min, x.dtype),
                     jnp.asarray(clamp_max, x.dtype))
    x = x.astype(jnp.float32)                           # x = x.float()
    if do_clip and not clip_packed:                     # float path keeps torch order
        x = jnp.clip(x, float(clamp_min), float(clamp_max))
    # (x - cmin) / (cmax - cmin) * 2 - 1  folded into  x * scale + bias
    o_ref[...] = (x * jnp.float32(scale) + jnp.float32(bias)).astype(o_ref.dtype)


def input_transform(x, clamp_min=0, clamp_max=255, *, out_dtype=jnp.float32,
                    lanes=512, rows_per_block=None, min_kernel_elems=65536):
    """Pallas TPU implementation of InputTransform.forward.

    Accepts any-rank / any-dtype input (e.g. NCHW uint8); returns `out_dtype`
    (float32 by default, matching the PyTorch module) of the same shape.
    clamp_min / clamp_max must be static Python scalars.
    """
    if clamp_max == clamp_min:
        raise ValueError("clamp_max must differ from clamp_min (division by zero).")

    inv_range = 1.0 / float(clamp_max - clamp_min)
    scale = 2.0 * inv_range
    bias = -2.0 * float(clamp_min) * inv_range - 1.0
    do_clip = clamp_min > 0 or clamp_max < 255          # same static condition as torch

    orig_shape = x.shape
    total = x.size

    # --- Small-input early-out: plain XLA beats kernel + pad/slice overhead.
    if total <= min_kernel_elems:
        xf = x.astype(jnp.float32)
        if do_clip:
            xf = jnp.clip(xf, float(clamp_min), float(clamp_max))
        return (xf * scale + bias).astype(out_dtype).reshape(orig_shape)

    # Packed-domain clip is only equivalent for integer inputs with integer,
    # in-range clamp bounds.
    clip_packed = bool(
        do_clip
        and jnp.issubdtype(x.dtype, jnp.integer)
        and float(clamp_min).is_integer()
        and float(clamp_max).is_integer()
        and jnp.iinfo(x.dtype).min <= clamp_min
        and clamp_max <= jnp.iinfo(x.dtype).max
    )

    in_bpe = jnp.dtype(x.dtype).itemsize
    out_bpe = jnp.dtype(out_dtype).itemsize

    # --- Pad only to the lane-slab alignment (lanes * 32 rows), not to a full
    # block; the partial trailing block is handled by the grid / Pallas masking.
    align_elems = lanes * _ROW_ALIGN
    padded_total = pl.cdiv(total, align_elems) * align_elems
    xf = x.reshape(-1)
    if padded_total != total:
        xf = jnp.pad(xf, (0, padded_total - total))
    m_rows = padded_total // lanes
    x2d = xf.reshape(m_rows, lanes)

    # --- Tile sizing: target ~12 MiB double-buffered VMEM (fits v5e's 16 MiB
    # scoped default and stays well under v7x's 64 MiB physical VMEM).
    if rows_per_block is None:
        budget = 12 * 1024 * 1024
        rows_per_block = budget // (2 * lanes * (in_bpe + out_bpe))
        rows_per_block = (rows_per_block // _ROW_ALIGN) * _ROW_ALIGN
        rows_per_block = max(_ROW_ALIGN, min(2048, rows_per_block))
    rows_per_block = min(rows_per_block, m_rows)

    grid = (pl.cdiv(m_rows, rows_per_block),)

    kernel = functools.partial(
        _input_transform_kernel,
        scale=scale, bias=bias,
        clamp_min=clamp_min, clamp_max=clamp_max,
        do_clip=do_clip, clip_packed=clip_packed,
    )

    cost = pl.CostEstimate(
        flops=2 * padded_total,
        transcendentals=0,
        bytes_accessed=padded_total * (in_bpe + out_bpe),
    )

    out2d = pl.pallas_call(
        kernel,
        out_shape=jax.ShapeDtypeStruct((m_rows, lanes), out_dtype),
        grid=grid,
        in_specs=[pl.BlockSpec((rows_per_block, lanes), lambda i: (i, 0))],
        out_specs=pl.BlockSpec((rows_per_block, lanes), lambda i: (i, 0)),
        compiler_params=pltpu.CompilerParams(
            dimension_semantics=("parallel",),
        ),
        cost_estimate=cost,
    )(x2d)

    if padded_total != total:
        return out2d.reshape(-1)[:total].reshape(orig_shape)
    return out2d.reshape(orig_shape)


if __name__ == "__main__":
    key = jax.random.PRNGKey(0)
    k0, k1 = jax.random.split(key)

    # NCHW image-like uint8 input at module-sized small shape.
    x = jax.random.randint(k0, (2, 4, 16, 16), 0, 256, dtype=jnp.int32).astype(
        jnp.uint8
    )
    ref = 2.0 * (x.astype(jnp.float32) / 255.0) - 1.0

    # 1) Default call: small input takes the jnp fast path.
    out = jax.block_until_ready(input_transform(x))
    assert out.shape == x.shape and out.dtype == jnp.float32
    assert jnp.max(jnp.abs(out - ref)) < 1e-5

    # 2) Force the Pallas kernel path on the same input.
    out_k = jax.block_until_ready(input_transform(x, min_kernel_elems=0))
    assert out_k.shape == x.shape and out_k.dtype == jnp.float32
    assert jnp.max(jnp.abs(out_k - ref)) < 1e-5

    # 3) Kernel path by default (unaligned size, >64K elems) with clipping,
    #    exercising the packed-u8 clip and the pad/un-pad branch.
    y = jax.random.randint(k1, (2, 3, 128, 129), 0, 256, dtype=jnp.int32).astype(
        jnp.uint8
    )
    out_y = jax.block_until_ready(input_transform(y, clamp_min=10, clamp_max=200))
    yf = jnp.clip(y.astype(jnp.float32), 10.0, 200.0)
    ref_y = 2.0 * (yf - 10.0) / 190.0 - 1.0
    assert out_y.shape == y.shape and out_y.dtype == jnp.float32
    assert jnp.max(jnp.abs(out_y - ref_y)) < 1e-5

    print("KERNEL_OK")
</pallas_src>

<mosaic_0001>
module attributes {stable_mosaic.version = 11 : i64} {
  func.func @_input_transform_kernel(%arg0: i32, %arg1: memref<32x512xi8, #tpu.memory_space<vmem>>, %arg2: memref<32x512xf32, #tpu.memory_space<vmem>>) attributes {dimension_semantics = [#tpu.dimension_semantics<parallel>], iteration_bounds = array<i64: 1>, scalar_prefetch = 0 : i64, scratch_operands = 0 : i64, tpu.core_type = #tpu.core_type<tc>, window_params = [{transform_indices = @transform_0, window_bounds = array<i64: 32, 512>}, {transform_indices = @transform_1, window_bounds = array<i64: 32, 512>}]} {
    %c0 = arith.constant 0 : index
    %c0_0 = arith.constant 0 : index
    %0 = vector.load %arg1[%c0, %c0_0] : memref<32x512xi8, #tpu.memory_space<vmem>>, vector<32x512xi8>
    %1 = arith.uitofp %0 : vector<32x512xi8> to vector<32x512xf32>
    %cst = arith.constant 0.00784313772 : f32
    %2 = vector.broadcast %cst : f32 to vector<32x512xf32>
    %3 = arith.mulf %1, %2 : vector<32x512xf32>
    %cst_1 = arith.constant -1.000000e+00 : f32
    %4 = vector.broadcast %cst_1 : f32 to vector<32x512xf32>
    %5 = arith.addf %3, %4 : vector<32x512xf32>
    %c0_2 = arith.constant 0 : index
    %c0_3 = arith.constant 0 : index
    %6 = vector.load %arg2[%c0_2, %c0_3] : memref<32x512xf32, #tpu.memory_space<vmem>>, vector<32x512xf32>
    tpu.vector_store %arg2[%c0_2, %c0_3], %5 {strides = array<i32>} : memref<32x512xf32, #tpu.memory_space<vmem>>, vector<32x512xf32>,
    return
  }
  func.func @transform_0(%arg0: i32) -> (i32, i32) {
    %c0_i32 = arith.constant 0 : i32
    %c0_i32_0 = arith.constant 0 : i32
    return %arg0, %c0_i32 : i32, i32
  }
  func.func @transform_1(%arg0: i32) -> (i32, i32) {
    %c0_i32 = arith.constant 0 : i32
    %c0_i32_0 = arith.constant 0 : i32
    return %arg0, %c0_i32 : i32, i32
  }
}

</mosaic_0001>

<llo_original>
// kernel: tpu_custom_call.1
$region0: #{tpu_custom_call.1}
  #allocation0 [shape = 'u32[]', space=smem, size = 0x4, offset = 0x4, fixed_abs, tag = 'smem constant byte address 0x4 - core index']
  #allocation1 [shape = 'u32[72,128]{1,0:T(1,128)}', space=vmem, size = 0x9000, scoped, tag = 'internal scratch']
  %s0 = inlined_call_operand.hbm [shape: u8[32,512], index: 0, kind: input, shape index: {}]
  %s1 = inlined_call_operand.hbm [shape: f32[32,512], index: 1, kind: output, shape index: {}]
  %s2 = sld [smem:[#allocation0]]
  $region18: #{tpu_custom_call.1} parent=0
    _
  %s4 = ssub.s32 1, %s2
  %s5 = scalar_select 0, %s4, %s2
  $region1: #{tpu_custom_call.1} parent=0
    #allocation2 [shape = 'u8[16384]{0}', space=vmem, size = 0x4000, scoped, tag = 'input window, operand 0, single buffered']
    #allocation3 [shape = 's32[1]{0}', space=sflag, size = 0x4, scoped, tag = 'scoped memory for tpu_custom_call.1']
    #allocation4 [shape = 's32[1]{0}', space=sflag, size = 0x4, scoped, tag = 'scoped memory for tpu_custom_call.1']
    #allocation5 [shape = 'u8[65536]{0}', space=vmem, size = 0x10000, scoped, tag = 'output window, operand 0, single buffered']
    %6 = vsyncpa [#allocation3], 0
    %7 = vsyncpa [#allocation4], 0
    // Predicated region
    $region2: #{tpu_custom_call.1} parent=1 // pred_check
      _
    $region3: #{tpu_custom_call.1} parent=1 // pred_check_branch
      %9 = sbr.rel (0) target = $region5
    $region4: #{tpu_custom_call.1} parent=1 // pred_region
      %11 = vsyncadd [#allocation3], 0
      %s13 = sshll.u32 %s0, 4
      %s14 = int_to_ptr.hbm [resolvable:$true] %s13
      %s15 = sshll.u32 [#allocation2], 4
      %s16 = int_to_ptr.vmem [resolvable:$true] %s15
      %18 = dma.hbm_to_vmem [thread:$0]  %s14, 512, %s16, [#allocation3]
    $region5: #{tpu_custom_call.1} parent=1 // pred_fallthru
      _
    // Predicated region
    $region6: #{tpu_custom_call.1} parent=1 // pred_check
      _
    $region7: #{tpu_custom_call.1} parent=1 // pred_check_branch
      %20 = sbr.rel (0) target = $region9
    $region8: #{tpu_custom_call.1} parent=1 // pred_region
      %22 = dma.done [#allocation3], 512
    $region9: #{tpu_custom_call.1} parent=1 // pred_fallthru
      _
    %v23 = vld [vmem:[#allocation2] sm:$0xff]
    %v24 = vld [vmem:[#allocation2 + $0x8] sm:$0xff]
    %v25 = vld [vmem:[#allocation2 + $0x10] sm:$0xff]
    %v26 = vld [vmem:[#allocation2 + $0x18] sm:$0xff]
    %v27 = vunpack.c.0.s8 %v23
    %v28 = vunpack.c.0.s8 %v24
    %v29 = vunpack.c.0.s8 %v25
    %v30 = vunpack.c.0.s8 %v26
    %v31 = vunpack.c.1.s8 %v23
    %v32 = vunpack.c.1.s8 %v24
    %v33 = vunpack.c.1.s8 %v25
    %v34 = vunpack.c.1.s8 %v26
    %v35 = vunpack.c.2.s8 %v23
    %v36 = vunpack.c.2.s8 %v24
    %v37 = vunpack.c.2.s8 %v25
    %v38 = vunpack.c.2.s8 %v26
    %v39 = vunpack.c.3.s8 %v23
    %v40 = vunpack.c.3.s8 %v24
    %v41 = vunpack.c.3.s8 %v25
    %v42 = vunpack.c.3.s8 %v26
    %v43 = vand.u32 %v27, 255
    %v44 = vand.u32 %v28, 255
    %v45 = vand.u32 %v29, 255
    %v46 = vand.u32 %v30, 255
    %v47 = vand.u32 %v31, 255
    %v48 = vand.u32 %v32, 255
    %v49 = vand.u32 %v33, 255
    %v50 = vand.u32 %v34, 255
    %v51 = vand.u32 %v35, 255
    %v52 = vand.u32 %v36, 255
    %v53 = vand.u32 %v37, 255
    %v54 = vand.u32 %v38, 255
    %v55 = vand.u32 %v39, 255
    %v56 = vand.u32 %v40, 255
    %v57 = vand.u32 %v41, 255
    %v58 = vand.u32 %v42, 255
    %v59 = vcvt.s32.f32 %v43
    %v60 = vcvt.s32.f32 %v44
    %v61 = vcvt.s32.f32 %v45
    %v62 = vcvt.s32.f32 %v46
    %v63 = vcvt.s32.f32 %v47
    %v64 = vcvt.s32.f32 %v48
    %v65 = vcvt.s32.f32 %v49
    %v66 = vcvt.s32.f32 %v50
    %v67 = vcvt.s32.f32 %v51
    %v68 = vcvt.s32.f32 %v52
    %v69 = vcvt.s32.f32 %v53
    %v70 = vcvt.s32.f32 %v54
    %v71 = vcvt.s32.f32 %v55
    %v72 = vcvt.s32.f32 %v56
    %v73 = vcvt.s32.f32 %v57
    %v74 = vcvt.s32.f32 %v58
    %v75 = vmul.f32 %v59, 0.007843138
    %v76 = vmul.f32 %v60, 0.007843138
    %v77 = vmul.f32 %v61, 0.007843138
    %v78 = vmul.f32 %v62, 0.007843138
    %v79 = vmul.f32 %v63, 0.007843138
    %v80 = vmul.f32 %v64, 0.007843138
    %v81 = vmul.f32 %v65, 0.007843138
    %v82 = vmul.f32 %v66, 0.007843138
    %v83 = vmul.f32 %v67, 0.007843138
    %v84 = vmul.f32 %v68, 0.007843138
    %v85 = vmul.f32 %v69, 0.007843138
    %v86 = vmul.f32 %v70, 0.007843138
    %v87 = vmul.f32 %v71, 0.007843138
    %v88 = vmul.f32 %v72, 0.007843138
    %v89 = vmul.f32 %v73, 0.007843138
    %v90 = vmul.f32 %v74, 0.007843138
    %v91 = vadd.f32 %v75, -1.0
    %v92 = vadd.f32 %v76, -1.0
    %v93 = vadd.f32 %v77, -1.0
    %v94 = vadd.f32 %v78, -1.0
    %v95 = vadd.f32 %v79, -1.0
    %v96 = vadd.f32 %v80, -1.0
    %v97 = vadd.f32 %v81, -1.0
    %v98 = vadd.f32 %v82, -1.0
    %v99 = vadd.f32 %v83, -1.0
    %v100 = vadd.f32 %v84, -1.0
    %v101 = vadd.f32 %v85, -1.0
    %v102 = vadd.f32 %v86, -1.0
    %v103 = vadd.f32 %v87, -1.0
    %v104 = vadd.f32 %v88, -1.0
    %v105 = vadd.f32 %v89, -1.0
    %v106 = vadd.f32 %v90, -1.0
    %107 = vst [vmem:[#allocation5] sm:$0xff] %v91
    %108 = vst [vmem:[#allocation5 + $0x8] sm:$0xff] %v92
    %109 = vst [vmem:[#allocation5 + $0x10] sm:$0xff] %v93
    %110 = vst [vmem:[#allocation5 + $0x18] sm:$0xff] %v94
    %111 = vst [vmem:[#allocation5 + $0x20] sm:$0xff] %v95
    %112 = vst [vmem:[#allocation5 + $0x28] sm:$0xff] %v96
    %113 = vst [vmem:[#allocation5 + $0x30] sm:$0xff] %v97
    %114 = vst [vmem:[#allocation5 + $0x38] sm:$0xff] %v98
    %115 = vst [vmem:[#allocation5 + $0x40] sm:$0xff] %v99
    %116 = vst [vmem:[#allocation5 + $0x48] sm:$0xff] %v100
    %117 = vst [vmem:[#allocation5 + $0x50] sm:$0xff] %v101
    %118 = vst [vmem:[#allocation5 + $0x58] sm:$0xff] %v102
    %119 = vst [vmem:[#allocation5 + $0x60] sm:$0xff] %v103
    %120 = vst [vmem:[#allocation5 + $0x68] sm:$0xff] %v104
    %121 = vst [vmem:[#allocation5 + $0x70] sm:$0xff] %v105
    %122 = vst [vmem:[#allocation5 + $0x78] sm:$0xff] %v106
    // Predicated region
    $region10: #{tpu_custom_call.1} parent=1 // pred_check
      _
    $region11: #{tpu_custom_call.1} parent=1 // pred_check_branch
      %124 = sbr.rel (0) target = $region13
    $region12: #{tpu_custom_call.1} parent=1 // pred_region
      %126 = vsyncadd [#allocation4], 0
      %s127 = sshll.u32 [#allocation5], 4
      %s128 = int_to_ptr.vmem [resolvable:$true] %s127
      %s129 = sshll.u32 %s1, 4
      %s130 = int_to_ptr.hbm [resolvable:$true] %s129
      %135 = dma.vmem_to_hbm [thread:$0]  %s128, 2048, %s130, [#allocation4], 512, 512, 32
    $region13: #{tpu_custom_call.1} parent=1 // pred_fallthru
      _
    // Predicated region
    $region14: #{tpu_custom_call.1} parent=1 // pred_check
      _
    $region15: #{tpu_custom_call.1} parent=1 // pred_check_branch
      %137 = sbr.rel (0) target = $region17
    $region16: #{tpu_custom_call.1} parent=1 // pred_region
      %139 = dma.done [#allocation4], 2048
    $region17: #{tpu_custom_call.1} parent=1 // pred_fallthru
      _
    %140 = vsyncpa [#allocation3], 1
    %141 = vsyncpa [#allocation4], 1

</llo_original>
